<compile_context>
chip_gen: v5e
topology: v5e:2x2
jax: 0.10.0
libtpu: 0.0.40
codegen_flags: <defaults>
</compile_context>

<pallas_src>
import functools

import jax
import jax.numpy as jnp
from jax.experimental import pallas as pl
from jax.experimental.pallas import tpu as pltpu


# ---------------------------------------------------------------------------
# Kernel: clamp the per-row colour scalar by channel, then broadcast-multiply
# against a lane-dense (tb, thw) tile of x.
# ---------------------------------------------------------------------------
def _colour_mul_kernel(c_ref, x_ref, o_ref, *, min_rgb, max_rgb, tb):
    # c_ref : (tb, 1)    raw (unclamped) colour scalars for this row-block
    # x_ref : (tb, thw)  lane-dense input tile
    # o_ref : (tb, thw)  output tile
    row = pl.program_id(0) * tb + jax.lax.broadcasted_iota(jnp.int32, c_ref.shape, 0)
    ch = row % 5                                  # channel within the 5-entry colour table
    c = c_ref[...]
    c_rgb = jnp.clip(c, min_rgb, max_rgb)         # channels 0,1,2 (R,G,B)
    c_ord = jnp.clip(c, 0.0, 1.0)                 # channel 4 (orders)
    c = jnp.where(ch == 3, c, jnp.where(ch == 4, c_ord, c_rgb))  # channel 3 (zeros) untouched
    o_ref[...] = (c * x_ref[...]).astype(o_ref.dtype)


def population_colour_rgb_forward(reds, greens, blues, zeros, orders, x,
                                  *, min_rgb, max_rgb):
    """Pallas implementation of PopulationColourRGBTransforms.forward.

    Args:
      reds/greens/blues/zeros/orders: (pop, patches, 1, 1, 1) float32
      x: (pop, patches, 5, H, W) float32
    Returns:
      (pop, patches, 5, H, W) == clamp-concat(colours) * x
    """
    pop, patches = reds.shape[0], reds.shape[1]
    _, _, C, H, W = x.shape
    assert C == 5
    rows = pop * patches * 5
    hw = H * W

    # Raw colour table; the per-channel clamp happens inside the kernel.
    colours = jnp.concatenate([reds, greens, blues, zeros, orders], axis=2)  # (pop,patches,5,1,1)
    col_flat = colours.reshape(rows, 1).astype(x.dtype)                      # (rows, 1)

    x_flat = x.reshape(rows, hw)                                             # (rows, HW) view

    # ---- Tile selection ----------------------------------------------------
    itemsize = jnp.dtype(x.dtype).itemsize
    sublane = max(8, 32 // itemsize)              # f32: 8, bf16: 16, int8/fp8: 32
    target_tile_bytes = 8 * 1024 * 1024           # ~8 MiB per x tile
    max_lane_block = 32768                        # lanes (multiple of 128)

    thw = hw if hw <= max_lane_block else max_lane_block
    tb = (target_tile_bytes // (thw * itemsize)) // sublane * sublane
    tb = max(sublane, tb)
    if tb >= rows:
        tb = rows                                 # full-dim block is always layout-legal
    grid_r = pl.cdiv(rows, tb)
    grid_hw = pl.cdiv(hw, thw)

    # v7x megacore: if the whole problem fits a single step, split the row axis
    # so the "parallel" grid actually shards across both TensorCores.
    if grid_r * grid_hw == 1 and rows >= 2 * sublane:
        tb = pl.cdiv(pl.cdiv(rows, 2), sublane) * sublane
        grid_r = pl.cdiv(rows, tb)

    kernel = functools.partial(_colour_mul_kernel,
                               min_rgb=float(min_rgb), max_rgb=float(max_rgb), tb=tb)

    out_flat = pl.pallas_call(
        kernel,
        out_shape=jax.ShapeDtypeStruct((rows, hw), x.dtype),
        grid_spec=pltpu.PrefetchScalarGridSpec(
            num_scalar_prefetch=0,
            grid=(grid_r, grid_hw),
            in_specs=[
                pl.BlockSpec((tb, 1), lambda i, j: (i, 0)),     # colour column per row-block
                pl.BlockSpec((tb, thw), lambda i, j: (i, j)),   # lane-dense x tile
            ],
            out_specs=pl.BlockSpec((tb, thw), lambda i, j: (i, j)),
        ),
        compiler_params=pltpu.CompilerParams(
            dimension_semantics=("parallel", "parallel"),
            vmem_limit_bytes=48 * 1024 * 1024,    # > default scoped limit, < v7x 64 MiB physical
        ),
    )(col_flat, x_flat)

    return out_flat.reshape(pop, patches, 5, H, W)


# Pure-JAX reference (mirrors the PyTorch forward) for a correctness check.
def _reference_forward(reds, greens, blues, zeros, orders, x, *, min_rgb, max_rgb):
    r = jnp.clip(reds, min_rgb, max_rgb)
    g = jnp.clip(greens, min_rgb, max_rgb)
    b = jnp.clip(blues, min_rgb, max_rgb)
    o = jnp.clip(orders, 0.0, 1.0)
    colours = jnp.concatenate([r, g, b, zeros, o], axis=2)  # (pop, patches, 5, 1, 1)
    return colours * x


if __name__ == "__main__":
    # Typical Arnheim-3 config defaults, fixed deterministically in-script.
    config = dict(initial_min_rgb=0.1, initial_max_rgb=0.9, min_rgb=0.0, max_rgb=1.0)
    pop_size, num_patches, H, W = 2, 4, 16, 16

    key = jax.random.PRNGKey(0)
    k_r, k_g, k_b, k_o, k_x = jax.random.split(key, 5)
    rgb_range = config["initial_max_rgb"] - config["initial_min_rgb"]

    shape_param = (pop_size, num_patches, 1, 1, 1)
    reds = jax.random.uniform(k_r, shape_param, jnp.float32) * rgb_range + config["initial_min_rgb"]
    greens = jax.random.uniform(k_g, shape_param, jnp.float32) * rgb_range + config["initial_min_rgb"]
    blues = jax.random.uniform(k_b, shape_param, jnp.float32) * rgb_range + config["initial_min_rgb"]
    zeros = jnp.ones(shape_param, jnp.float32)
    orders = jax.random.uniform(k_o, shape_param, jnp.float32)

    # x: (pop, patches, 5, H, W) — what the module broadcasts colours against.
    x = jax.random.normal(k_x, (pop_size, num_patches, 5, H, W), jnp.float32)

    fwd = functools.partial(population_colour_rgb_forward,
                            min_rgb=config["min_rgb"], max_rgb=config["max_rgb"])
    out = fwd(reds, greens, blues, zeros, orders, x)
    out = jax.block_until_ready(out)

    ref = _reference_forward(reds, greens, blues, zeros, orders, x,
                             min_rgb=config["min_rgb"], max_rgb=config["max_rgb"])
    assert out.shape == (pop_size, num_patches, 5, H, W)
    assert jnp.allclose(out, ref, atol=1e-6, rtol=1e-6)

    print("KERNEL_OK")
</pallas_src>

<mosaic_0001>
module attributes {stable_mosaic.version = 11 : i64} {
  func.func @_colour_mul_kernel(%arg0: i32, %arg1: i32, %arg2: memref<24x1xf32, #tpu.memory_space<vmem>>, %arg3: memref<24x256xf32, #tpu.memory_space<vmem>>, %arg4: memref<24x256xf32, #tpu.memory_space<vmem>>) attributes {dimension_semantics = [#tpu.dimension_semantics<parallel>, #tpu.dimension_semantics<parallel>], iteration_bounds = array<i64: 2, 1>, scalar_prefetch = 0 : i64, scratch_operands = 0 : i64, tpu.core_type = #tpu.core_type<tc>, window_params = [{transform_indices = @transform_0, window_bounds = array<i64: 24, 1>}, {transform_indices = @transform_1, window_bounds = array<i64: 24, 256>}, {transform_indices = @transform_2, window_bounds = array<i64: 24, 256>}]} {
    %c24_i32 = arith.constant 24 : i32
    %0 = arith.muli %arg0, %c24_i32 : i32
    %1 = tpu.iota {dimensions = array<i32: 0>} : vector<24x1xi32>
    %2 = vector.broadcast %0 : i32 to vector<24x1xi32>
    %3 = arith.addi %2, %1 : vector<24x1xi32>
    %c5_i32 = arith.constant 5 : i32
    %c0_i32 = arith.constant 0 : i32
    %4 = arith.cmpi eq, %c5_i32, %c0_i32 : i32
    %c1_i32 = arith.constant 1 : i32
    %5 = arith.select %4, %c1_i32, %c5_i32 : i32
    %6 = vector.broadcast %5 : i32 to vector<24x1xi32>
    %7 = arith.remsi %3, %6 : vector<24x1xi32>
    %c0_i32_0 = arith.constant 0 : i32
    %8 = vector.broadcast %c0_i32_0 : i32 to vector<24x1xi32>
    %9 = arith.cmpi ne, %7, %8 : vector<24x1xi32>
    %c0_i32_1 = arith.constant 0 : i32
    %10 = vector.broadcast %c0_i32_1 : i32 to vector<24x1xi32>
    %11 = arith.cmpi slt, %7, %10 : vector<24x1xi32>
    %c0_i32_2 = arith.constant 0 : i32
    %12 = arith.cmpi slt, %5, %c0_i32_2 : i32
    %13 = vector.broadcast %12 : i1 to vector<24x1xi1>
    %14 = vector.broadcast %13 : vector<24x1xi1> to vector<24x1xi1>
    %15 = arith.xori %11, %14 : vector<24x1xi1>
    %16 = arith.andi %15, %9 : vector<24x1xi1>
    %17 = vector.broadcast %5 : i32 to vector<24x1xi32>
    %18 = arith.addi %7, %17 : vector<24x1xi32>
    %19 = arith.select %16, %18, %7 : vector<24x1xi1>, vector<24x1xi32>
    %c0 = arith.constant 0 : index
    %c0_3 = arith.constant 0 : index
    %20 = vector.load %arg2[%c0, %c0_3] : memref<24x1xf32, #tpu.memory_space<vmem>>, vector<24x1xf32>
    %cst = arith.constant 0.000000e+00 : f32
    %cst_4 = arith.constant 1.000000e+00 : f32
    %21 = vector.broadcast %cst : f32 to vector<24x1xf32>
    %22 = arith.maximumf %21, %20 : vector<24x1xf32>
    %23 = vector.broadcast %cst_4 : f32 to vector<24x1xf32>
    %24 = arith.minimumf %23, %22 : vector<24x1xf32>
    %cst_5 = arith.constant 0.000000e+00 : f32
    %cst_6 = arith.constant 1.000000e+00 : f32
    %25 = vector.broadcast %cst_5 : f32 to vector<24x1xf32>
    %26 = arith.maximumf %25, %20 : vector<24x1xf32>
    %27 = vector.broadcast %cst_6 : f32 to vector<24x1xf32>
    %28 = arith.minimumf %27, %26 : vector<24x1xf32>
    %c3_i32 = arith.constant 3 : i32
    %29 = vector.broadcast %c3_i32 : i32 to vector<24x1xi32>
    %30 = arith.cmpi eq, %19, %29 : vector<24x1xi32>
    %c4_i32 = arith.constant 4 : i32
    %31 = vector.broadcast %c4_i32 : i32 to vector<24x1xi32>
    %32 = arith.cmpi eq, %19, %31 : vector<24x1xi32>
    %33 = arith.select %32, %28, %24 : vector<24x1xi1>, vector<24x1xf32>
    %34 = arith.select %30, %20, %33 : vector<24x1xi1>, vector<24x1xf32>
    %c0_7 = arith.constant 0 : index
    %c0_8 = arith.constant 0 : index
    %35 = vector.load %arg3[%c0_7, %c0_8] : memref<24x256xf32, #tpu.memory_space<vmem>>, vector<24x256xf32>
    %36 = vector.broadcast %34 : vector<24x1xf32> to vector<24x256xf32>
    %37 = arith.mulf %36, %35 : vector<24x256xf32>
    %c0_9 = arith.constant 0 : index
    %c0_10 = arith.constant 0 : index
    %38 = vector.load %arg4[%c0_9, %c0_10] : memref<24x256xf32, #tpu.memory_space<vmem>>, vector<24x256xf32>
    tpu.vector_store %arg4[%c0_9, %c0_10], %37 {strides = array<i32>} : memref<24x256xf32, #tpu.memory_space<vmem>>, vector<24x256xf32>,
    return
  }
  func.func @transform_0(%arg0: i32, %arg1: i32) -> (i32, i32) {
    %c0_i32 = arith.constant 0 : i32
    %c0_i32_0 = arith.constant 0 : i32
    return %arg0, %c0_i32 : i32, i32
  }
  func.func @transform_1(%arg0: i32, %arg1: i32) -> (i32, i32) {
    %c0_i32 = arith.constant 0 : i32
    return %arg0, %arg1 : i32, i32
  }
  func.func @transform_2(%arg0: i32, %arg1: i32) -> (i32, i32) {
    %c0_i32 = arith.constant 0 : i32
    return %arg0, %arg1 : i32, i32
  }
}

</mosaic_0001>

<llo_original>
// kernel: tpu_custom_call.1
$region0: #{tpu_custom_call.1}
  #allocation0 [shape = 'u32[]', space=smem, size = 0x4, offset = 0x4, fixed_abs, tag = 'smem constant byte address 0x4 - core index']
  #allocation1 [shape = 'u32[72,128]{1,0:T(1,128)}', space=vmem, size = 0x9000, scoped, tag = 'internal scratch']
  %s0 = inlined_call_operand.vmem [shape: f32[40,1], index: 0, kind: input, shape index: {}]
  %s1 = inlined_call_operand.hbm [shape: f32[40,256], index: 1, kind: input, shape index: {}]
  %s2 = inlined_call_operand.hbm [shape: f32[40,256], index: 2, kind: output, shape index: {}]
  %s3 = sld [smem:[#allocation0]]
  $region45: #{tpu_custom_call.1} parent=0
    _
  %s5 = ssub.s32 1, %s3
  %s6 = scalar_select 0, %s5, %s3
  $region1: #{tpu_custom_call.1} parent=0
    #allocation2 [shape = 'u8[49152]{0}', space=vmem, size = 0xc000, scoped, tag = 'input window, operand 1']
    #allocation3 [shape = 's32[2]{0}', space=sflag, size = 0x8, scoped, tag = 'scoped memory for tpu_custom_call.1']
    #allocation4 [shape = 's32[2]{0}', space=sflag, size = 0x8, scoped, tag = 'scoped memory for tpu_custom_call.1']
    #allocation5 [shape = 'u8[49152]{0}', space=vmem, size = 0xc000, scoped, tag = 'output window, operand 0']
    %7 = vsyncpa [#allocation3], 0
    %s8 = scalar_lea.sflag [#allocation3], 1
    %9 = vsyncpa %s8, 0
    %10 = vsyncpa [#allocation4], 0
    %s11 = scalar_lea.sflag [#allocation4], 1
    %12 = vsyncpa %s11, 0
    loop: start=0, step=1, limit=4
    $region2: #{tpu_custom_call.1} parent=1 // loop_pre_header
      _
    $region3: #{tpu_custom_call.1} parent=1 // loop_header
      %s14 = sphi 0, %s18
      %p15 = scmp.ge.s32.totalorder %s14, 4
      %s21 = sphi 0, %s33
      %s22 = sphi 0, %s29
      %s23 = sphi 0, %s21
      %s24 = sphi 0, %s22
      %s25 = sphi 0, %s23
      %s26 = sphi 0, %s24
      %s36 = sphi 0, %s38
      %s39 = sphi 0, %s36
      %s40 = sphi 0, %s39
      %s56 = sphi 0, %s40
      %s64 = sphi 0, %s66
      %s67 = sphi 0, %s64
      %s68 = sphi 0, %s67
      %s84 = sphi 0, %s68
      %s92 = sphi 0, %s94
      %s95 = sphi 0, %s92
      %s96 = sphi 0, %s95
      %s112 = sphi 0, %s96
    $region4: #{tpu_custom_call.1} parent=1 // loop_header_branch
      %17 = sbr.rel (%p15) target = $region8
    $region5: #{tpu_custom_call.1} parent=1 // loop_body
      %s19 = ssub.s32 %s14, 1
      %s20 = ssub.s32 %s14, 2
      %s27 = sadd.s32 1, %s22
      %p28 = scmp.ge.s32.totalorder %s27, 1
      %s29 = scalar_select %p28, 0, %s27
      %s30 = sadd.s32 1, %s21
      %s31 = scalar_select %p28, %s30, %s21
      %p32 = scmp.ge.s32.totalorder %s31, 2
      %s33 = scalar_select %p32, 0, %s31
      %s34 = ssub.s32 %s21, %s33
      %p35 = scmp.eq.s32.totalorder %s34, 0
      %s37 = sadd.s32 %s36, 1
      %s38 = scalar_select %p35, %s36, %s37
      %p41 = pneg %p35
      %p42 = scmp.eq.s32.totalorder %s14, 1
      %p43 = por %p41, %p42
      %p44 = scmp.ne.s32.totalorder %s36, %s39
      %p45 = scmp.eq.s32.totalorder %s14, 0
      %p46 = por %p44, %p45
      %p47 = scmp.ne.s32.totalorder %s36, %s39
      %p48 = scmp.eq.s32.totalorder %s19, 1
      %p49 = por %p47, %p48
      %p50 = scmp.ne.s32.totalorder %s39, %s40
      %p51 = scmp.eq.s32.totalorder %s19, 0
      %p52 = por %p50, %p51
      %p53 = scmp.ne.s32.totalorder %s39, %s40
      %p54 = scmp.eq.s32.totalorder %s20, 1
      %p55 = por %p53, %p54
      %p57 = scmp.ne.s32.totalorder %s40, %s56
      %p58 = scmp.eq.s32.totalorder %s20, 0
      %p59 = por %p57, %p58
      %s60 = ssub.s32 %s21, %s33
      %s61 = ssub.s32 %s22, %s29
      %s62 = sor.u32 %s60, %s61
      %p63 = scmp.eq.s32.totalorder %s62, 0
      %s65 = sadd.s32 %s64, 1
      %s66 = scalar_select %p63, %s64, %s65
      %p69 = pneg %p63
      %p70 = scmp.eq.s32.totalorder %s14, 1
      %p71 = por %p69, %p70
      %p72 = scmp.ne.s32.totalorder %s64, %s67
      %p73 = scmp.eq.s32.totalorder %s14, 0
      %p74 = por %p72, %p73
      %p75 = scmp.ne.s32.totalorder %s64, %s67
      %p76 = scmp.eq.s32.totalorder %s19, 1
      %p77 = por %p75, %p76
      %p78 = scmp.ne.s32.totalorder %s67, %s68
      %p79 = scmp.eq.s32.totalorder %s19, 0
      %p80 = por %p78, %p79
      %p81 = scmp.ne.s32.totalorder %s67, %s68
      %p82 = scmp.eq.s32.totalorder %s20, 1
      %p83 = por %p81, %p82
      %p85 = scmp.ne.s32.totalorder %s68, %s84
      %p86 = scmp.eq.s32.totalorder %s20, 0
      %p87 = por %p85, %p86
      %s88 = ssub.s32 %s21, %s33
      %s89 = ssub.s32 %s22, %s29
      %s90 = sor.u32 %s88, %s89
      %p91 = scmp.eq.s32.totalorder %s90, 0
      %s93 = sadd.s32 %s92, 1
      %s94 = scalar_select %p91, %s92, %s93
      %p97 = pneg %p91
      %p98 = scmp.eq.s32.totalorder %s14, 1
      %p99 = por %p97, %p98
      %p100 = scmp.ne.s32.totalorder %s92, %s95
      %p101 = scmp.eq.s32.totalorder %s14, 0
      %p102 = por %p100, %p101
      %p103 = scmp.ne.s32.totalorder %s92, %s95
      %p104 = scmp.eq.s32.totalorder %s19, 1
      %p105 = por %p103, %p104
      %p106 = scmp.ne.s32.totalorder %s95, %s96
      %p107 = scmp.eq.s32.totalorder %s19, 0
      %p108 = por %p106, %p107
      %p109 = scmp.ne.s32.totalorder %s95, %s96
      %p110 = scmp.eq.s32.totalorder %s20, 1
      %p111 = por %p109, %p110
      %p113 = scmp.ne.s32.totalorder %s96, %s112
      %p114 = scmp.eq.s32.totalorder %s20, 0
      %p115 = por %p113, %p114
      %p116 = scmp.le.s32.totalorder 1, %s14
      %p117 = scmp.lt.s32.totalorder %s14, 3
      %p118 = pnand %p116, %p117
      %p119 = pneg %p118
      // Predicated region
      $region9: #{tpu_custom_call.1} parent=5 // pred_check
        _
      $region10: #{tpu_custom_call.1} parent=5 // pred_check_branch
        %121 = sbr.rel (%p118) target = $region12
      $region11: #{tpu_custom_call.1} parent=5 // pred_region
        %s122 = ssub.s32 %s14, 1
      $region12: #{tpu_custom_call.1} parent=5 // pred_fallthru
        _
      %p123 = scmp.lt.s32.totalorder %s14, 2
      // Predicated region
      $region13: #{tpu_custom_call.1} parent=5 // pred_check
        %p124 = pneg %p123
      $region14: #{tpu_custom_call.1} parent=5 // pred_check_branch
        %126 = sbr.rel (%p124) target = $region16
      $region15: #{tpu_custom_call.1} parent=5 // pred_region
        // Predicated region
        $region17: #{tpu_custom_call.1} parent=15 // pred_check
          %p127 = pneg %p46
        $region18: #{tpu_custom_call.1} parent=15 // pred_check_branch
          %129 = sbr.rel (%p127) target = $region20
        $region19: #{tpu_custom_call.1} parent=15 // pred_region
          %s130 = smul.u32 3, %s21
          %s131 = ssub.s32 5, %s130
          %p132 = scmp.lt.s32.totalorder %s131, 3
          %s133 = scalar_select %p132, %s131, 3
          %s134 = smul.u32 8, %s133
          %p135 = scmp.lt.s32.totalorder %s130, 4
          %s136 = scalar_select %p135, %s130, 4
          %s137 = smul.addr %s136, 8
          %s138 = scalar_lea.vmem %s0, %s137
          %s139 = smul.u32 3, %s21
          %s140 = ssub.s32 5, %s139
          %p141 = scmp.lt.s32.totalorder %s140, 3
          %s142 = scalar_select %p141, %s140, 3
          %s143 = smul.u32 8, %s142
        $region20: #{tpu_custom_call.1} parent=15 // pred_fallthru
          _
        // Predicated region
        $region21: #{tpu_custom_call.1} parent=15 // pred_check
          %p144 = pneg %p74
        $region22: #{tpu_custom_call.1} parent=15 // pred_check_branch
          %146 = sbr.rel (%p144) target = $region24
        $region23: #{tpu_custom_call.1} parent=15 // pred_region
          %s147 = sand.u32 %s64, 1
          %s148 = scalar_lea.sflag [#allocation3], %s147
          %s149 = sand.u32 %s64, 1
          %s150 = smul.addr %s149, 48
          %s151 = scalar_lea.vmem [#allocation2], %s150
          %s152 = smul.u32 3, %s21
          %s153 = smul.u32 2, %s22
          %s154 = ssub.s32 5, %s152
          %p155 = scmp.lt.s32.totalorder %s154, 3
          %s156 = scalar_select %p155, %s154, 3
          %s157 = smul.u32 8, %s156
          %s158 = smul.u32 %s157, 2
          %s159 = ssub.s32 48, %s158
          %s160 = sshll.u32 %s159, 4
          %161 = vsyncadd %s148, %s160
          %p162 = scmp.ne.s32.totalorder 0, %s158
          %s163 = smul.addr %s152, 2
          %s164 = sadd.s32 %s153, %s163
          %s165 = smul.addr %s164, 8
          %s166 = scalar_lea.hbm %s1, %s165
          %s167 = smul.u32 16, %s156
          %s168 = sshll.u32 %s166, 4
          %s169 = int_to_ptr.hbm [resolvable:$true] %s168
          %s170 = sshll.u32 %s151, 4
          %s171 = int_to_ptr.vmem [resolvable:$true] %s170
          %s172 = sshll.u32 %s167, 4
          %176 = dma.hbm_to_vmem [thread:$0]  (%p162), %s169, %s172, %s171, %s148, 256, 256, 16
        $region24: #{tpu_custom_call.1} parent=15 // pred_fallthru
          _
      $region16: #{tpu_custom_call.1} parent=5 // pred_fallthru
        _
      %p177 = scmp.le.s32.totalorder 1, %s14
      %p178 = scmp.lt.s32.totalorder %s14, 3
      %p179 = pnand %p177, %p178
      %p180 = pneg %p179
      // Predicated region
      $region25: #{tpu_custom_call.1} parent=5 // pred_check
        _
      $region26: #{tpu_custom_call.1} parent=5 // pred_check_branch
        %182 = sbr.rel (%p179) target = $region28
      $region27: #{tpu_custom_call.1} parent=5 // pred_region
        %s183 = ssub.s32 %s14, 1
        %s184 = sand.u32 %s67, 1
        %s185 = scalar_lea.sflag [#allocation3], %s184
        %s186 = sand.u32 %s67, 1
        %s187 = smul.addr %s186, 48
        %s188 = scalar_lea.vmem [#allocation2], %s187
        // Predicated region
        $region29: #{tpu_custom_call.1} parent=27 // pred_check
          %p189 = pneg %p80
        $region30: #{tpu_custom_call.1} parent=27 // pred_check_branch
          %191 = sbr.rel (%p189) target = $region32
        $region31: #{tpu_custom_call.1} parent=27 // pred_region
          %193 = dma.done %s185, 768
        $region32: #{tpu_custom_call.1} parent=27 // pred_fallthru
          _
        %s194 = smul.u32 3, %s23
        %s195 = ssub.s32 5, %s194
        %p196 = scmp.lt.s32.totalorder %s195, 3
        %s197 = scalar_select %p196, %s195, 3
        %s198 = smul.u32 8, %s197
        %p199 = scmp.lt.s32.totalorder %s194, 4
        %s200 = scalar_select %p199, %s194, 4
        %s201 = smul.addr %s200, 8
        %s202 = scalar_lea.vmem %s0, %s201
        %p203 = pneg %p52
        %p204 = pneg %p49
        %s205 = sand.u32 %s67, 1
        %s206 = scalar_lea.sflag [#allocation3], %s205
        %s207 = sand.u32 %s67, 1
        %s208 = smul.addr %s207, 48
        %s209 = scalar_lea.vmem [#allocation2], %s208
        %p210 = pneg %p80
        %p211 = pneg %p77
        %p212 = pneg %p108
        %p213 = pneg %p105
        %s214 = sand.u32 %s95, 1
        %s215 = scalar_lea.sflag [#allocation4], %s214
        %s216 = sand.u32 %s95, 1
        %s217 = smul.addr %s216, 48
        %s218 = scalar_lea.vmem [#allocation5], %s217
        %s219 = smul.u32 3, %s23
        %s220 = ssub.s32 5, %s219
        %p221 = scmp.lt.s32.totalorder %s220, 3
        %s222 = scalar_select %p221, %s220, 3
        %s223 = smul.u32 8, %s222
        %p224 = scmp.lt.s32.totalorder %s219, 4
        %s225 = scalar_select %p224, %s219, 4
        %s226 = smul.addr %s225, 8
        %s227 = scalar_lea.vmem %s0, %s226
        %s228 = smul.u32 3, %s23
        %s229 = ssub.s32 5, %s228
        %p230 = scmp.lt.s32.totalorder %s229, 3
        %s231 = scalar_select %p230, %s229, 3
        %s232 = smul.u32 8, %s231
        %s233 = smul.u32 3, %s23
        %s234 = smul.u32 2, %s24
        %s235 = ssub.s32 5, %s233
        %p236 = scmp.lt.s32.totalorder %s235, 3
        %s237 = scalar_select %p236, %s235, 3
        %s238 = smul.u32 8, %s237
        %s239 = smul.u32 %s238, 2
        %s240 = smul.u32 3, %s23
        %s241 = smul.u32 2, %s24
        %s242 = ssub.s32 5, %s240
        %p243 = scmp.lt.s32.totalorder %s242, 3
        %s244 = scalar_select %p243, %s242, 3
        %s245 = smul.u32 8, %s244
        %s246 = smul.u32 %s245, 2
        %s247 = smul.u32 %s23, 24
        %v248 = vlaneseq
        %v249 = vshrl.u32 %v248, 7
        %v250 = vadd.s32 %v249, 8
        %v251 = vadd.s32 %v249, 16
        %v252 = vstv %s247
        %v253 = vadd.s32 %v252, %v249
        %v254 = vadd.s32 %v252, %v250
        %v255 = vadd.s32 %v252, %v251
        %vm256 = vcmp.lt.s32.totalorder %v253, 0
        %v257 = vsub.s32 0, %v253
        %v258 = vsel %vm256, %v257, %v253
        %v259 = vand.u32 %v258, 65535
        %v260 = vshrl.u32 %v258, 16
        %v262 = vmul.u32 %v259, 52429
        %v263 = vmul.u32 %v259, 52428
        %v264 = vmul.u32 %v260, 52429
        %v265 = vmul.u32 %v260, 52428
        %v266 = vshll.u32 %v263, 16
        %v267 = vshrl.u32 %v263, 16
        %v268 = vshll.u32 %v264, 16
        %v269 = vshrl.u32 %v264, 16
        %vm270 = vc.u32 %v262, %v266
        %v271 = vsel %vm270, 1, 0
        %v272 = vadd.s32 %v262, %v266
        %v273 = vadd.s32 %v265, %v271
        %vm274 = vc.u32 %v272, %v268
        %v275 = vsel %vm274, 1, 0
        %v276 = vadd.s32 %v272, %v268
        %v277 = vadd.s32 %v273, %v275
        %v278 = vadd.s32 %v277, %v267
        %v279 = vadd.s32 %v278, %v269
        %v280 = vshrl.u32 %v279, 2
        %v281 = vmul.u32 %v280, 5
        %v282 = vsub.s32 %v258, %v281
        %v283 = vsub.s32 0, %v282
        %v284 = vsel %vm256, %v283, %v282
        %vm285 = vcmp.lt.s32.totalorder %v254, 0
        %v286 = vsub.s32 0, %v254
        %v287 = vsel %vm285, %v286, %v254
        %v288 = vand.u32 %v287, 65535
        %v289 = vshrl.u32 %v287, 16
        %v291 = vmul.u32 %v288, 52429
        %v292 = vmul.u32 %v288, 52428
        %v293 = vmul.u32 %v289, 52429
        %v294 = vmul.u32 %v289, 52428
        %v295 = vshll.u32 %v292, 16
        %v296 = vshrl.u32 %v292, 16
        %v297 = vshll.u32 %v293, 16
        %v298 = vshrl.u32 %v293, 16
        %vm299 = vc.u32 %v291, %v295
        %v300 = vsel %vm299, 1, 0
        %v301 = vadd.s32 %v291, %v295
        %v302 = vadd.s32 %v294, %v300
        %vm303 = vc.u32 %v301, %v297
        %v304 = vsel %vm303, 1, 0
        %v305 = vadd.s32 %v301, %v297
        %v306 = vadd.s32 %v302, %v304
        %v307 = vadd.s32 %v306, %v296
        %v308 = vadd.s32 %v307, %v298
        %v309 = vshrl.u32 %v308, 2
        %v310 = vmul.u32 %v309, 5
        %v311 = vsub.s32 %v287, %v310
        %v312 = vsub.s32 0, %v311
        %v313 = vsel %vm285, %v312, %v311
        %vm314 = vcmp.lt.s32.totalorder %v255, 0
        %v315 = vsub.s32 0, %v255
        %v316 = vsel %vm314, %v315, %v255
        %v317 = vand.u32 %v316, 65535
        %v318 = vshrl.u32 %v316, 16
        %v320 = vmul.u32 %v317, 52429
        %v321 = vmul.u32 %v317, 52428
        %v322 = vmul.u32 %v318, 52429
        %v323 = vmul.u32 %v318, 52428
        %v324 = vshll.u32 %v321, 16
        %v325 = vshrl.u32 %v321, 16
        %v326 = vshll.u32 %v322, 16
        %v327 = vshrl.u32 %v322, 16
        %vm328 = vc.u32 %v320, %v324
        %v329 = vsel %vm328, 1, 0
        %v330 = vadd.s32 %v320, %v324
        %v331 = vadd.s32 %v323, %v329
        %vm332 = vc.u32 %v330, %v326
        %v333 = vsel %vm332, 1, 0
        %v334 = vadd.s32 %v330, %v326
        %v335 = vadd.s32 %v331, %v333
        %v336 = vadd.s32 %v335, %v325
        %v337 = vadd.s32 %v336, %v327
        %v338 = vshrl.u32 %v337, 2
        %v339 = vmul.u32 %v338, 5
        %v340 = vsub.s32 %v316, %v339
        %v341 = vsub.s32 0, %v340
        %v342 = vsel %vm314, %v341, %v340
        %vm343 = vcmp.ne.s32.totalorder %v284, 0
        %vm344 = vcmp.ne.s32.totalorder %v313, 0
        %vm345 = vcmp.ne.s32.totalorder %v342, 0
        %vm346 = vcmp.lt.s32.totalorder %v284, 0
        %vm347 = vcmp.lt.s32.totalorder %v313, 0
        %vm348 = vcmp.lt.s32.totalorder %v342, 0
        %vm349 = vmand %vm346, %vm343
        %vm350 = vmand %vm347, %vm344
        %vm351 = vmand %vm348, %vm345
        %v352 = vadd.s32 %v284, 5
        %v353 = vadd.s32 %v313, 5
        %v354 = vadd.s32 %v342, 5
        %v355 = vsel %vm349, %v352, %v284
        %v356 = vsel %vm350, %v353, %v313
        %v357 = vsel %vm351, %v354, %v342
        %v358 = vld [vmem:[%s227] sm:$0xff]
        %v359 = vld [vmem:[%s227 + $0x8] sm:$0xff]
        %v360 = vld [vmem:[%s227 + $0x10] sm:$0xff]
        %v361 = vmax.f32 %v358, 0.0
        %v362 = vmax.f32 %v359, 0.0
        %v363 = vmax.f32 %v360, 0.0
        %v364 = vmin.f32 %v361, 1.0
        %v365 = vmin.f32 %v362, 1.0
        %v366 = vmin.f32 %v363, 1.0
        %vm367 = vcmp.eq.s32.totalorder %v355, 3
        %vm368 = vcmp.eq.s32.totalorder %v356, 3
        %vm369 = vcmp.eq.s32.totalorder %v357, 3
        %v370 = vsel %vm367, %v358, %v364
        %v371 = vsel %vm368, %v359, %v365
        %v372 = vsel %vm369, %v360, %v366
        %v373 = vld [vmem:[%s188] sm:$0xff]
        %v374 = vld [vmem:[%s188 + $0x8] sm:$0xff]
        %v375 = vld [vmem:[%s188 + $0x10] sm:$0xff]
        %v376 = vld [vmem:[%s188 + $0x18] sm:$0xff]
        %v377 = vld [vmem:[%s188 + $0x20] sm:$0xff]
        %v378 = vld [vmem:[%s188 + $0x28] sm:$0xff]
        %380 = vset.pattern.permute.xlu0 0
        %381 = vperm.xlu0 %380, %v370
        %v382 = vpop.permute.xlu0 %381
        %385 = vset.pattern.permute.xlu0 0
        %386 = vperm.xlu0 %385, %v371
        %v387 = vpop.permute.xlu0 %386
        %390 = vset.pattern.permute.xlu0 0
        %391 = vperm.xlu0 %390, %v372
        %v392 = vpop.permute.xlu0 %391
        %v394 = vmul.f32 %v382, %v373
        %v395 = vmul.f32 %v382, %v374
        %v396 = vmul.f32 %v387, %v375
        %v397 = vmul.f32 %v387, %v376
        %v398 = vmul.f32 %v392, %v377
        %v399 = vmul.f32 %v392, %v378
        %400 = vst [vmem:[%s218] sm:$0xff] %v394
        %401 = vst [vmem:[%s218 + $0x8] sm:$0xff] %v395
        %402 = vst [vmem:[%s218 + $0x10] sm:$0xff] %v396
        %403 = vst [vmem:[%s218 + $0x18] sm:$0xff] %v397
        %404 = vst [vmem:[%s218 + $0x20] sm:$0xff] %v398
        %405 = vst [vmem:[%s218 + $0x28] sm:$0xff] %v399
        %s406 = sand.u32 %s95, 1
        %s407 = scalar_lea.sflag [#allocation4], %s406
        %s408 = sand.u32 %s95, 1
        %s409 = smul.addr %s408, 48
        %s410 = scalar_lea.vmem [#allocation5], %s409
        // Predicated region
        $region33: #{tpu_custom_call.1} parent=27 // pred_check
          %p411 = pneg %p105
        $region34: #{tpu_custom_call.1} parent=27 // pred_check_branch
          %413 = sbr.rel (%p411) target = $region36
        $region35: #{tpu_custom_call.1} parent=27 // pred_region
          %s414 = smul.u32 3, %s23
          %s415 = smul.u32 2, %s24
          %s416 = ssub.s32 5, %s414
          %p417 = scmp.lt.s32.totalorder %s416, 3
          %s418 = scalar_select %p417, %s416, 3
          %s419 = smul.u32 8, %s418
          %s420 = smul.u32 %s419, 2
          %s421 = ssub.s32 48, %s420
          %s422 = sshll.u32 %s421, 4
          %423 = vsyncadd %s407, %s422
          %p424 = scmp.ne.s32.totalorder 0, %s420
          %s425 = smul.addr %s414, 2
          %s426 = sadd.s32 %s415, %s425
          %s427 = smul.addr %s426, 8
          %s428 = scalar_lea.hbm %s2, %s427
          %s429 = smul.u32 16, %s418
          %s430 = sshll.u32 %s410, 4
          %s431 = int_to_ptr.vmem [resolvable:$true] %s430
          %s432 = sshll.u32 %s428, 4
          %s433 = int_to_ptr.hbm [resolvable:$true] %s432
          %s434 = sshll.u32 %s429, 4
          %438 = dma.vmem_to_hbm [thread:$0]  (%p424), %s431, %s434, %s433, %s407, 256, 256, 16
        $region36: #{tpu_custom_call.1} parent=27 // pred_fallthru
          _
      $region28: #{tpu_custom_call.1} parent=5 // pred_fallthru
        _
      %p439 = scmp.le.s32.totalorder 2, %s14
      // Predicated region
      $region37: #{tpu_custom_call.1} parent=5 // pred_check
        %p440 = pneg %p439
      $region38: #{tpu_custom_call.1} parent=5 // pred_check_branch
        %442 = sbr.rel (%p440) target = $region40
      $region39: #{tpu_custom_call.1} parent=5 // pred_region
        %s443 = ssub.s32 %s14, 2
        // Predicated region
        $region41: #{tpu_custom_call.1} parent=39 // pred_check
          %p444 = pneg %p111
        $region42: #{tpu_custom_call.1} parent=39 // pred_check_branch
          %446 = sbr.rel (%p444) target = $region44
        $region43: #{tpu_custom_call.1} parent=39 // pred_region
          %s447 = sand.u32 %s96, 1
          %s448 = scalar_lea.sflag [#allocation4], %s447
          %s449 = sand.u32 %s96, 1
          %s450 = smul.addr %s449, 48
          %s451 = scalar_lea.vmem [#allocation5], %s450
          %453 = dma.done %s448, 768
        $region44: #{tpu_custom_call.1} parent=39 // pred_fallthru
          _
      $region40: #{tpu_custom_call.1} parent=5 // pred_fallthru
        _
    $region6: #{tpu_custom_call.1} parent=1 // loop_footer
      %s18 = sadd.s32 1, %s14
    $region7: #{tpu_custom_call.1} parent=1 // loop_footer_branch
      %13 = sbr.rel target = $region3
    $region8: #{tpu_custom_call.1} parent=1 // loop_exit
      _
    %454 = vsyncpa [#allocation3], 1
    %s455 = scalar_lea.sflag [#allocation3], 1
    %456 = vsyncpa %s455, 1
    %457 = vsyncpa [#allocation4], 1
    %s458 = scalar_lea.sflag [#allocation4], 1
    %459 = vsyncpa %s458, 1

</llo_original>
